<compile_context>
chip_gen: v7x
topology: tpu7x:2x2x1
jax: 0.10.0
libtpu: 0.0.40
codegen_flags: <defaults>
</compile_context>

<pallas_src>
import functools

import jax
import jax.numpy as jnp
from jax.experimental import pallas as pl
from jax.experimental.pallas import tpu as pltpu


def _round_up(x, m):
    return ((x + m - 1) // m) * m


def critic_kernel(obs_ref, act_ref,
                  w1o_ref, w1a_ref, b1_ref,
                  w2_ref, b2_ref,
                  w3_ref, b3_ref,
                  q_ref):
    """Fused twin-Q MLP on one batch tile.

    q[:, 0] = Q1(obs, act), q[:, 1] = Q2(obs, act)
    with q = W3 @ relu(W2 @ relu(W1_obs@obs + W1_act@act + b1) + b2) + b3
    (W2 block-diagonal, W3 column-packed -> the two heads never mix).
    """
    cdt = w2_ref.dtype  # compute dtype for the MXU (f32 or bf16)

    # Layer 1 (split-K over the obs/action concat) + ReLU.
    h = jnp.dot(obs_ref[...].astype(cdt), w1o_ref[...],
                preferred_element_type=jnp.float32)
    h = h + jnp.dot(act_ref[...].astype(cdt), w1a_ref[...],
                    preferred_element_type=jnp.float32)
    h = jnp.maximum(h + b1_ref[...], 0.0)

    # Layer 2 (block-diagonal -> both heads in one matmul) + ReLU.
    h = jnp.dot(h.astype(cdt), w2_ref[...],
                preferred_element_type=jnp.float32) + b2_ref[...]
    h = jnp.maximum(h, 0.0)

    # Output layer -> (TB, 2): column 0 is q1, column 1 is q2.
    q = jnp.dot(h.astype(cdt), w3_ref[...],
                preferred_element_type=jnp.float32) + b3_ref[...]
    q_ref[...] = q.astype(q_ref.dtype)


def make_qfunction_params(key, input_dim, hidden_dim):
    """Deterministic synthetic init (reproducible; matches the module's shapes)."""
    k1, k2, k3 = jax.random.split(key, 3)
    scale1 = 1.0 / jnp.sqrt(jnp.float32(input_dim))
    scale2 = 1.0 / jnp.sqrt(jnp.float32(hidden_dim))
    w1 = jax.random.normal(k1, (input_dim, hidden_dim), jnp.float32) * scale1
    b1 = jnp.zeros((1, hidden_dim), jnp.float32)
    w2 = jax.random.normal(k2, (hidden_dim, hidden_dim), jnp.float32) * scale2
    b2 = jnp.zeros((1, hidden_dim), jnp.float32)
    w3 = jax.random.normal(k3, (hidden_dim, 1), jnp.float32) * scale2
    b3 = jnp.zeros((1, 1), jnp.float32)
    return (w1, b1, w2, b2, w3, b3)


def pack_twin_params(params_q1, params_q2, obs_dim, compute_dtype=jnp.float32):
    """Fuse the two Q-heads into one weight set (block-diagonal packing)."""
    w1a, b1a, w2a, b2a, w3a, b3a = params_q1
    w1b, b1b, w2b, b2b, w3b, b3b = params_q2
    h = w2a.shape[0]

    # Layer-1 weights, split along K into obs / action parts, heads along N.
    w1_obs = jnp.concatenate([w1a[:obs_dim], w1b[:obs_dim]], axis=1)   # (obs_dim, 2H)
    w1_act = jnp.concatenate([w1a[obs_dim:], w1b[obs_dim:]], axis=1)   # (act_dim, 2H)
    b1 = jnp.concatenate([b1a, b1b], axis=1)                           # (1, 2H)

    # Block-diagonal layer-2 weights: heads stay independent.
    w2 = jnp.zeros((2 * h, 2 * h), jnp.float32)
    w2 = w2.at[:h, :h].set(w2a).at[h:, h:].set(w2b)                    # (2H, 2H)
    b2 = jnp.concatenate([b2a, b2b], axis=1)                           # (1, 2H)

    # Output weights packed into two columns.
    w3 = jnp.zeros((2 * h, 2), jnp.float32)
    w3 = w3.at[:h, 0:1].set(w3a).at[h:, 1:2].set(w3b)                  # (2H, 2)
    b3 = jnp.concatenate([b3a, b3b], axis=1)                           # (1, 2)

    cdt = compute_dtype
    return (w1_obs.astype(cdt), w1_act.astype(cdt), b1.astype(jnp.float32),
            w2.astype(cdt), b2.astype(jnp.float32),
            w3.astype(cdt), b3.astype(jnp.float32))


@functools.partial(jax.jit, static_argnames=("block_batch", "compute_dtype"))
def critic_forward(obs, action, params_q1, params_q2,
                   block_batch=512, compute_dtype=jnp.float32):
    assert obs.shape[0] == action.shape[0]
    obs = obs.astype(jnp.float32)
    action = action.astype(jnp.float32)

    batch, obs_dim = obs.shape
    act_dim = action.shape[1]

    packed = pack_twin_params(params_q1, params_q2, obs_dim, compute_dtype)
    w1_obs, w1_act, b1, w2, b2, w3, b3 = packed

    # Batch tile: as large as sensible (>=512 amortizes per-step overhead),
    # clamped to the (sublane-rounded) batch for small inputs.
    tb = min(block_batch, _round_up(batch, 8))
    batch_p = _round_up(batch, tb)
    if batch_p != batch:
        pad = batch_p - batch
        obs = jnp.pad(obs, ((0, pad), (0, 0)))
        action = jnp.pad(action, ((0, pad), (0, 0)))
    grid = (batch_p // tb,)

    # Weights/biases: full-array blocks, grid-invariant index_map -> resident
    # in VMEM across all batch tiles (fetched once).
    def resident(arr):
        return pl.BlockSpec(arr.shape, lambda i: (0, 0))

    q_packed = pl.pallas_call(
        critic_kernel,
        out_shape=jax.ShapeDtypeStruct((batch_p, 2), jnp.float32),
        grid=grid,
        in_specs=[
            pl.BlockSpec((tb, obs_dim), lambda i: (i, 0)),   # obs tile
            pl.BlockSpec((tb, act_dim), lambda i: (i, 0)),   # action tile
            resident(w1_obs), resident(w1_act), resident(b1),
            resident(w2), resident(b2),
            resident(w3), resident(b3),
        ],
        out_specs=pl.BlockSpec((tb, 2), lambda i: (i, 0)),
        compiler_params=pltpu.CompilerParams(
            dimension_semantics=("parallel",),       # v7x: shard batch over 2 TCs
            vmem_limit_bytes=32 * 1024 * 1024,       # safe on v5e/v6e/v7x
        ),
    )(obs, action, w1_obs, w1_act, b1, w2, b2, w3, b3)

    q_packed = q_packed[:batch]
    return q_packed[:, 0:1], q_packed[:, 1:2]


if __name__ == "__main__":
    # Small shapes consistent with the module's int-latent_dim branch
    # (Critic(latent_dim=16, action_shape=(4,), hidden_dim=32)).
    batch = 8
    latent_dim = 16      # obs_dim (int)
    action_dim = 4       # action_shape[0]
    hidden_dim = 32
    input_dim = latent_dim + action_dim

    key = jax.random.PRNGKey(0)
    k_obs, k_act, k_q1, k_q2 = jax.random.split(key, 4)

    obs = jax.random.normal(k_obs, (batch, latent_dim), jnp.float32)
    action = jax.random.normal(k_act, (batch, action_dim), jnp.float32)

    params_q1 = make_qfunction_params(k_q1, input_dim, hidden_dim)
    params_q2 = make_qfunction_params(k_q2, input_dim, hidden_dim)

    q1, q2 = critic_forward(obs, action, params_q1, params_q2)
    jax.block_until_ready((q1, q2))

    # Reference check against plain-JAX forward (same math as the PyTorch module).
    def ref_q(x, p):
        w1, b1, w2, b2, w3, b3 = p
        h = jnp.maximum(x @ w1 + b1, 0.0)
        h = jnp.maximum(h @ w2 + b2, 0.0)
        return h @ w3 + b3

    x = jnp.concatenate([obs, action], axis=1)
    r1 = ref_q(x, params_q1)
    r2 = ref_q(x, params_q2)
    assert q1.shape == (batch, 1) and q2.shape == (batch, 1)
    assert jnp.allclose(q1, r1, atol=1e-5) and jnp.allclose(q2, r2, atol=1e-5)

    print("KERNEL_OK")
</pallas_src>

<mosaic_0001>
module attributes {stable_mosaic.version = 11 : i64} {
  func.func @critic_kernel(%arg0: i32, %arg1: memref<8x16xf32, #tpu.memory_space<vmem>>, %arg2: memref<8x4xf32, #tpu.memory_space<vmem>>, %arg3: memref<16x64xf32, #tpu.memory_space<vmem>>, %arg4: memref<4x64xf32, #tpu.memory_space<vmem>>, %arg5: memref<1x64xf32, #tpu.memory_space<vmem>>, %arg6: memref<64x64xf32, #tpu.memory_space<vmem>>, %arg7: memref<1x64xf32, #tpu.memory_space<vmem>>, %arg8: memref<64x2xf32, #tpu.memory_space<vmem>>, %arg9: memref<1x2xf32, #tpu.memory_space<vmem>>, %arg10: memref<8x2xf32, #tpu.memory_space<vmem>>) attributes {dimension_semantics = [#tpu.dimension_semantics<parallel>], iteration_bounds = array<i64: 1>, scalar_prefetch = 0 : i64, scratch_operands = 0 : i64, tpu.core_type = #tpu.core_type<tc>, window_params = [{transform_indices = @transform_0, window_bounds = array<i64: 8, 16>}, {transform_indices = @transform_1, window_bounds = array<i64: 8, 4>}, {pipeline_mode = #tpu.pipeline_mode<synchronous>, transform_indices = @transform_2, window_bounds = array<i64: 16, 64>}, {pipeline_mode = #tpu.pipeline_mode<synchronous>, transform_indices = @transform_3, window_bounds = array<i64: 4, 64>}, {pipeline_mode = #tpu.pipeline_mode<synchronous>, transform_indices = @transform_4, window_bounds = array<i64: 1, 64>}, {pipeline_mode = #tpu.pipeline_mode<synchronous>, transform_indices = @transform_5, window_bounds = array<i64: 64, 64>}, {pipeline_mode = #tpu.pipeline_mode<synchronous>, transform_indices = @transform_6, window_bounds = array<i64: 1, 64>}, {pipeline_mode = #tpu.pipeline_mode<synchronous>, transform_indices = @transform_7, window_bounds = array<i64: 64, 2>}, {pipeline_mode = #tpu.pipeline_mode<synchronous>, transform_indices = @transform_8, window_bounds = array<i64: 1, 2>}, {transform_indices = @transform_9, window_bounds = array<i64: 8, 2>}]} {
    %c0 = arith.constant 0 : index
    %c0_0 = arith.constant 0 : index
    %0 = vector.load %arg1[%c0, %c0_0] : memref<8x16xf32, #tpu.memory_space<vmem>>, vector<8x16xf32>
    %c0_1 = arith.constant 0 : index
    %c0_2 = arith.constant 0 : index
    %1 = vector.load %arg3[%c0_1, %c0_2] : memref<16x64xf32, #tpu.memory_space<vmem>>, vector<16x64xf32>
    %cst = arith.constant dense<0.000000e+00> : vector<8x64xf32>
    %2 = tpu.matmul %0, %1, %cst {dimension_numbers = #tpu.dot_dimension_numbers<[1], [0], [0], [1], [0, 0, 1, 1], [], []>} : vector<8x16xf32>, vector<16x64xf32>, vector<8x64xf32> -> vector<8x64xf32>
    %c0_3 = arith.constant 0 : index
    %c0_4 = arith.constant 0 : index
    %3 = vector.load %arg2[%c0_3, %c0_4] : memref<8x4xf32, #tpu.memory_space<vmem>>, vector<8x4xf32>
    %c0_5 = arith.constant 0 : index
    %c0_6 = arith.constant 0 : index
    %4 = vector.load %arg4[%c0_5, %c0_6] : memref<4x64xf32, #tpu.memory_space<vmem>>, vector<4x64xf32>
    %cst_7 = arith.constant dense<0.000000e+00> : vector<8x64xf32>
    %5 = tpu.matmul %3, %4, %cst_7 {dimension_numbers = #tpu.dot_dimension_numbers<[1], [0], [0], [1], [0, 0, 1, 1], [], []>} : vector<8x4xf32>, vector<4x64xf32>, vector<8x64xf32> -> vector<8x64xf32>
    %6 = arith.addf %2, %5 : vector<8x64xf32>
    %c0_8 = arith.constant 0 : index
    %c0_9 = arith.constant 0 : index
    %7 = vector.load %arg5[%c0_8, %c0_9] : memref<1x64xf32, #tpu.memory_space<vmem>>, vector<1x64xf32>
    %8 = vector.broadcast %7 : vector<1x64xf32> to vector<8x64xf32>
    %9 = arith.addf %6, %8 : vector<8x64xf32>
    %cst_10 = arith.constant 0.000000e+00 : f32
    %10 = vector.broadcast %cst_10 : f32 to vector<8x64xf32>
    %11 = arith.maximumf %9, %10 : vector<8x64xf32>
    %c0_11 = arith.constant 0 : index
    %c0_12 = arith.constant 0 : index
    %12 = vector.load %arg6[%c0_11, %c0_12] : memref<64x64xf32, #tpu.memory_space<vmem>>, vector<64x64xf32>
    %cst_13 = arith.constant dense<0.000000e+00> : vector<8x64xf32>
    %13 = tpu.matmul %11, %12, %cst_13 {dimension_numbers = #tpu.dot_dimension_numbers<[1], [0], [0], [1], [0, 0, 1, 1], [], []>} : vector<8x64xf32>, vector<64x64xf32>, vector<8x64xf32> -> vector<8x64xf32>
    %c0_14 = arith.constant 0 : index
    %c0_15 = arith.constant 0 : index
    %14 = vector.load %arg7[%c0_14, %c0_15] : memref<1x64xf32, #tpu.memory_space<vmem>>, vector<1x64xf32>
    %15 = vector.broadcast %14 : vector<1x64xf32> to vector<8x64xf32>
    %16 = arith.addf %13, %15 : vector<8x64xf32>
    %cst_16 = arith.constant 0.000000e+00 : f32
    %17 = vector.broadcast %cst_16 : f32 to vector<8x64xf32>
    %18 = arith.maximumf %16, %17 : vector<8x64xf32>
    %c0_17 = arith.constant 0 : index
    %c0_18 = arith.constant 0 : index
    %19 = vector.load %arg8[%c0_17, %c0_18] : memref<64x2xf32, #tpu.memory_space<vmem>>, vector<64x2xf32>
    %cst_19 = arith.constant dense<0.000000e+00> : vector<8x2xf32>
    %20 = tpu.matmul %18, %19, %cst_19 {dimension_numbers = #tpu.dot_dimension_numbers<[1], [0], [0], [1], [0, 0, 1, 1], [], []>} : vector<8x64xf32>, vector<64x2xf32>, vector<8x2xf32> -> vector<8x2xf32>
    %c0_20 = arith.constant 0 : index
    %c0_21 = arith.constant 0 : index
    %21 = vector.load %arg9[%c0_20, %c0_21] : memref<1x2xf32, #tpu.memory_space<vmem>>, vector<1x2xf32>
    %22 = vector.broadcast %21 : vector<1x2xf32> to vector<8x2xf32>
    %23 = arith.addf %20, %22 : vector<8x2xf32>
    %c0_22 = arith.constant 0 : index
    %c0_23 = arith.constant 0 : index
    %24 = vector.load %arg10[%c0_22, %c0_23] : memref<8x2xf32, #tpu.memory_space<vmem>>, vector<8x2xf32>
    tpu.vector_store %arg10[%c0_22, %c0_23], %23 {strides = array<i32>} : memref<8x2xf32, #tpu.memory_space<vmem>>, vector<8x2xf32>,
    return
  }
  func.func @transform_0(%arg0: i32) -> (i32, i32) {
    %c0_i32 = arith.constant 0 : i32
    %c0_i32_0 = arith.constant 0 : i32
    return %arg0, %c0_i32 : i32, i32
  }
  func.func @transform_1(%arg0: i32) -> (i32, i32) {
    %c0_i32 = arith.constant 0 : i32
    %c0_i32_0 = arith.constant 0 : i32
    return %arg0, %c0_i32 : i32, i32
  }
  func.func @transform_2(%arg0: i32) -> (i32, i32) {
    %c0_i32 = arith.constant 0 : i32
    %c0_i32_0 = arith.constant 0 : i32
    %c0_i32_1 = arith.constant 0 : i32
    return %c0_i32, %c0_i32_0 : i32, i32
  }
  func.func @transform_3(%arg0: i32) -> (i32, i32) {
    %c0_i32 = arith.constant 0 : i32
    %c0_i32_0 = arith.constant 0 : i32
    %c0_i32_1 = arith.constant 0 : i32
    return %c0_i32, %c0_i32_0 : i32, i32
  }
  func.func @transform_4(%arg0: i32) -> (i32, i32) {
    %c0_i32 = arith.constant 0 : i32
    %c0_i32_0 = arith.constant 0 : i32
    %c0_i32_1 = arith.constant 0 : i32
    return %c0_i32, %c0_i32_0 : i32, i32
  }
  func.func @transform_5(%arg0: i32) -> (i32, i32) {
    %c0_i32 = arith.constant 0 : i32
    %c0_i32_0 = arith.constant 0 : i32
    %c0_i32_1 = arith.constant 0 : i32
    return %c0_i32, %c0_i32_0 : i32, i32
  }
  func.func @transform_6(%arg0: i32) -> (i32, i32) {
    %c0_i32 = arith.constant 0 : i32
    %c0_i32_0 = arith.constant 0 : i32
    %c0_i32_1 = arith.constant 0 : i32
    return %c0_i32, %c0_i32_0 : i32, i32
  }
  func.func @transform_7(%arg0: i32) -> (i32, i32) {
    %c0_i32 = arith.constant 0 : i32
    %c0_i32_0 = arith.constant 0 : i32
    %c0_i32_1 = arith.constant 0 : i32
    return %c0_i32, %c0_i32_0 : i32, i32
  }
  func.func @transform_8(%arg0: i32) -> (i32, i32) {
    %c0_i32 = arith.constant 0 : i32
    %c0_i32_0 = arith.constant 0 : i32
    %c0_i32_1 = arith.constant 0 : i32
    return %c0_i32, %c0_i32_0 : i32, i32
  }
  func.func @transform_9(%arg0: i32) -> (i32, i32) {
    %c0_i32 = arith.constant 0 : i32
    %c0_i32_0 = arith.constant 0 : i32
    return %arg0, %c0_i32 : i32, i32
  }
}

</mosaic_0001>

<llo_original>
// kernel: critic_forward.1
$region0: #{critic_forward.1}
  #allocation0 [shape = 'u32[]', space=smem, size = 0x4, offset = 0x4, fixed_abs, tag = 'smem constant byte address 0x4 - core index']
  #allocation1 [shape = 'u32[144,128]{1,0:T(1,128)}', space=vmem, size = 0x12000, scoped, tag = 'internal scratch']
  %s0 = inlined_call_operand.vmem [shape: f32[8,16], index: 0, kind: input, shape index: {}]
  %s1 = inlined_call_operand.vmem [shape: f32[8,4], index: 1, kind: input, shape index: {}]
  %s2 = inlined_call_operand.vmem [shape: f32[16,64], index: 2, kind: input, shape index: {}]
  %s3 = inlined_call_operand.vmem [shape: f32[4,64], index: 3, kind: input, shape index: {}]
  %s4 = inlined_call_operand.vmem [shape: f32[1,64], index: 4, kind: input, shape index: {}]
  %s5 = inlined_call_operand.vmem [shape: f32[64,64], index: 5, kind: input, shape index: {}]
  %s6 = inlined_call_operand.vmem [shape: f32[1,64], index: 6, kind: input, shape index: {}]
  %s7 = inlined_call_operand.vmem [shape: f32[64,2], index: 7, kind: input, shape index: {}]
  %s8 = inlined_call_operand.vmem [shape: f32[1,2], index: 8, kind: input, shape index: {}]
  %s9 = inlined_call_operand.vmem [shape: f32[8,2], index: 9, kind: output, shape index: {}]
  %s10 = sld [smem:[#allocation0]]
  $region46: #{critic_forward.1} parent=0
    _
  %s12 = ssub.s32 1, %s10
  %s13 = scalar_select 0, %s12, %s10
  // Predicated region
  $region2: #{critic_forward.1} parent=0 // pred_check
    _
  $region3: #{critic_forward.1} parent=0 // pred_check_branch
    %15 = sbr.rel (0) target = $region5
  $region4: #{critic_forward.1} parent=0 // pred_region
    _
  $region5: #{critic_forward.1} parent=0 // pred_fallthru
    _
  // Predicated region
  $region6: #{critic_forward.1} parent=0 // pred_check
    _
  $region7: #{critic_forward.1} parent=0 // pred_check_branch
    %17 = sbr.rel (0) target = $region9
  $region8: #{critic_forward.1} parent=0 // pred_region
    _
  $region9: #{critic_forward.1} parent=0 // pred_fallthru
    _
  // Predicated region
  $region10: #{critic_forward.1} parent=0 // pred_check
    _
  $region11: #{critic_forward.1} parent=0 // pred_check_branch
    %19 = sbr.rel (0) target = $region13
  $region12: #{critic_forward.1} parent=0 // pred_region
    _
  $region13: #{critic_forward.1} parent=0 // pred_fallthru
    _
  // Predicated region
  $region14: #{critic_forward.1} parent=0 // pred_check
    _
  $region15: #{critic_forward.1} parent=0 // pred_check_branch
    %21 = sbr.rel (0) target = $region17
  $region16: #{critic_forward.1} parent=0 // pred_region
    _
  $region17: #{critic_forward.1} parent=0 // pred_fallthru
    _
  // Predicated region
  $region18: #{critic_forward.1} parent=0 // pred_check
    _
  $region19: #{critic_forward.1} parent=0 // pred_check_branch
    %23 = sbr.rel (0) target = $region21
  $region20: #{critic_forward.1} parent=0 // pred_region
    _
  $region21: #{critic_forward.1} parent=0 // pred_fallthru
    _
  // Predicated region
  $region22: #{critic_forward.1} parent=0 // pred_check
    _
  $region23: #{critic_forward.1} parent=0 // pred_check_branch
    %25 = sbr.rel (0) target = $region25
  $region24: #{critic_forward.1} parent=0 // pred_region
    _
  $region25: #{critic_forward.1} parent=0 // pred_fallthru
    _
  // Predicated region
  $region26: #{critic_forward.1} parent=0 // pred_check
    _
  $region27: #{critic_forward.1} parent=0 // pred_check_branch
    %27 = sbr.rel (0) target = $region29
  $region28: #{critic_forward.1} parent=0 // pred_region
    _
  $region29: #{critic_forward.1} parent=0 // pred_fallthru
    _
  // Predicated region
  $region30: #{critic_forward.1} parent=0 // pred_check
    _
  $region31: #{critic_forward.1} parent=0 // pred_check_branch
    %29 = sbr.rel (0) target = $region33
  $region32: #{critic_forward.1} parent=0 // pred_region
    _
  $region33: #{critic_forward.1} parent=0 // pred_fallthru
    _
  // Predicated region
  $region34: #{critic_forward.1} parent=0 // pred_check
    _
  $region35: #{critic_forward.1} parent=0 // pred_check_branch
    %31 = sbr.rel (0) target = $region37
  $region36: #{critic_forward.1} parent=0 // pred_region
    _
  $region37: #{critic_forward.1} parent=0 // pred_fallthru
    _
  %v32 = vld [vmem:[%s0] sm:$0xff]
  %v33 = vld [vmem:[%s2] sm:$0xff]
  %v34 = vld [vmem:[%s2 + $0x8] sm:$0xff]
  %v35 = vld [vmem:[%s1] sm:$0xff]
  %v36 = vld [vmem:[%s3] sm:$0xf]
  %vm37 = vcmask 31744
  %v39 = vsel %vm37, %v35, 0
  %vm41 = vcmask 1043456
  %v43 = vsel %vm41, %v36, 0
  %45 = vmatprep.subr.mxu0 0.0
  %46 = vmatpush1.msra.mxu0 %v43
  %47 = vmatprep.subr.mxu0 0.0
  %48 = vmatpush1.msra.mxu0 0.0
  %49 = vmatprep.subr.mxu0 0.0
  %50 = vmatpush1.msra.mxu0 0.0
  %51 = vmatprep.subr.mxu0 0.0
  %52 = vmatpush1.msra.mxu0 0.0
  %53 = vmatprep.subr.mxu0 0.0
  %54 = vmatpush1.msra.mxu0 0.0
  %55 = vmatprep.subr.mxu0 0.0
  %56 = vmatpush1.msra.mxu0 0.0
  %57 = vmatprep.subr.mxu0 0.0
  %58 = vmatpush1.msra.mxu0 0.0
  %59 = vmatprep.subr.mxu0 0.0
  %60 = vmatpush1.msra.mxu0 0.0
  %61 = vmatprep.subr.mxu0 0.0
  %62 = vmatpush1.msra.mxu0 0.0
  %63 = vmatprep.subr.mxu0 0.0
  %64 = vmatpush1.msra.mxu0 0.0
  %65 = vmatprep.subr.mxu0 0.0
  %66 = vmatpush1.msra.mxu0 0.0
  %67 = vmatprep.subr.mxu0 0.0
  %68 = vmatpush1.msra.mxu0 0.0
  %69 = vmatprep.subr.mxu0 0.0
  %70 = vmatpush1.msra.mxu0 0.0
  %71 = vmatprep.subr.mxu0 0.0
  %72 = vmatpush1.msra.mxu0 0.0
  %73 = vmatprep.subr.mxu0 0.0
  %74 = vmatpush1.msra.mxu0 0.0
  %75 = vmatprep.subr.mxu0 0.0
  %76 = vmatpush1.msra.mxu0 0.0
  %77 = vmatprep.subr.mxu0 0.0
  %78 = vmatpush1.msra.mxu0 0.0
  %79 = vmatprep.subr.mxu0 0.0
  %80 = vmatpush1.msra.mxu0 0.0
  %81 = vmatprep.subr.mxu0 0.0
  %82 = vmatpush1.msra.mxu0 0.0
  %83 = vmatprep.subr.mxu0 0.0
  %84 = vmatpush1.msra.mxu0 0.0
  %85 = vmatprep.subr.mxu0 0.0
  %86 = vmatpush1.msra.mxu0 0.0
  %87 = vmatprep.subr.mxu0 0.0
  %88 = vmatpush1.msra.mxu0 0.0
  %89 = vmatprep.subr.mxu0 0.0
  %90 = vmatpush1.msra.mxu0 0.0
  %91 = vmatprep.subr.mxu0 0.0
  %92 = vmatpush1.msra.mxu0 0.0
  %93 = vmatprep.subr.mxu0 0.0
  %94 = vmatpush1.msra.mxu0 0.0
  %95 = vmatprep.subr.mxu0 0.0
  %96 = vmatpush1.msra.mxu0 0.0
  %97 = vmatprep.subr.mxu0 0.0
  %98 = vmatpush1.msra.mxu0 0.0
  %99 = vmatprep.subr.mxu0 0.0
  %100 = vmatpush1.msra.mxu0 0.0
  %101 = vmatprep.subr.mxu0 0.0
  %102 = vmatpush1.msra.mxu0 0.0
  %103 = vmatprep.subr.mxu0 0.0
  %104 = vmatpush1.msra.mxu0 0.0
  %105 = vmatprep.subr.mxu0 0.0
  %106 = vmatpush1.msra.mxu0 0.0
  %107 = vmatprep.subr.mxu0 0.0
  %108 = vmatpush1.msra.mxu0 0.0
  %109 = vmatprep.mubr.f32.mxu0 0.0
  %110 = vmatmul.mubr.f32.gmra.mrb[0].mxu0 %v39
  %v111 = vpop.f32.mrb[0].mxu0
  %v112 = vadd.f32 0.0, %v111
  %v113 = vpop.f32.mrb[0].mxu0
  %114 = vdwg.mxu0
  %vm115 = vcmask 130048
  %v117 = vsel %vm115, %v32, 0
  %119 = vmatprep.subr.mxu0 0.0
  %120 = vmatpush1.msra.mxu0 %v33
  %121 = vmatprep.subr.mxu0 0.0
  %122 = vmatpush1.msra.mxu0 %v34
  %123 = vmatprep.subr.mxu0 0.0
  %124 = vmatpush1.msra.mxu0 0.0
  %125 = vmatprep.subr.mxu0 0.0
  %126 = vmatpush1.msra.mxu0 0.0
  %127 = vmatprep.subr.mxu0 0.0
  %128 = vmatpush1.msra.mxu0 0.0
  %129 = vmatprep.subr.mxu0 0.0
  %130 = vmatpush1.msra.mxu0 0.0
  %131 = vmatprep.subr.mxu0 0.0
  %132 = vmatpush1.msra.mxu0 0.0
  %133 = vmatprep.subr.mxu0 0.0
  %134 = vmatpush1.msra.mxu0 0.0
  %135 = vmatprep.subr.mxu0 0.0
  %136 = vmatpush1.msra.mxu0 0.0
  %137 = vmatprep.subr.mxu0 0.0
  %138 = vmatpush1.msra.mxu0 0.0
  %139 = vmatprep.subr.mxu0 0.0
  %140 = vmatpush1.msra.mxu0 0.0
  %141 = vmatprep.subr.mxu0 0.0
  %142 = vmatpush1.msra.mxu0 0.0
  %143 = vmatprep.subr.mxu0 0.0
  %144 = vmatpush1.msra.mxu0 0.0
  %145 = vmatprep.subr.mxu0 0.0
  %146 = vmatpush1.msra.mxu0 0.0
  %147 = vmatprep.subr.mxu0 0.0
  %148 = vmatpush1.msra.mxu0 0.0
  %149 = vmatprep.subr.mxu0 0.0
  %150 = vmatpush1.msra.mxu0 0.0
  %151 = vmatprep.subr.mxu0 0.0
  %152 = vmatpush1.msra.mxu0 0.0
  %153 = vmatprep.subr.mxu0 0.0
  %154 = vmatpush1.msra.mxu0 0.0
  %155 = vmatprep.subr.mxu0 0.0
  %156 = vmatpush1.msra.mxu0 0.0
  %157 = vmatprep.subr.mxu0 0.0
  %158 = vmatpush1.msra.mxu0 0.0
  %159 = vmatprep.subr.mxu0 0.0
  %160 = vmatpush1.msra.mxu0 0.0
  %161 = vmatprep.subr.mxu0 0.0
  %162 = vmatpush1.msra.mxu0 0.0
  %163 = vmatprep.subr.mxu0 0.0
  %164 = vmatpush1.msra.mxu0 0.0
  %165 = vmatprep.subr.mxu0 0.0
  %166 = vmatpush1.msra.mxu0 0.0
  %167 = vmatprep.subr.mxu0 0.0
  %168 = vmatpush1.msra.mxu0 0.0
  %169 = vmatprep.subr.mxu0 0.0
  %170 = vmatpush1.msra.mxu0 0.0
  %171 = vmatprep.subr.mxu0 0.0
  %172 = vmatpush1.msra.mxu0 0.0
  %173 = vmatprep.subr.mxu0 0.0
  %174 = vmatpush1.msra.mxu0 0.0
  %175 = vmatprep.subr.mxu0 0.0
  %176 = vmatpush1.msra.mxu0 0.0
  %177 = vmatprep.subr.mxu0 0.0
  %178 = vmatpush1.msra.mxu0 0.0
  %179 = vmatprep.subr.mxu0 0.0
  %180 = vmatpush1.msra.mxu0 0.0
  %181 = vmatprep.subr.mxu0 0.0
  %182 = vmatpush1.msra.mxu0 0.0
  %183 = vmatprep.mubr.f32.mxu0 0.0
  %184 = vmatmul.mubr.f32.gmra.mrb[0].mxu0 %v117
  %v185 = vpop.f32.mrb[0].mxu0
  %v186 = vadd.f32 %v112, %v185
  %v187 = vpop.f32.mrb[0].mxu0
  %188 = vdwg.mxu0
  %v189 = vld [vmem:[%s4] sm:$0x1]
  %v191 = vlaneseq
  %v192 = vshrl.u32 %v191, 7
  %v193 = vsub.s32 0, %v192
  %v194 = vrot.slane %v189, %v193
  %v196 = vadd.f32 %v186, %v194
  %v197 = vmax.f32 %v196, 0.0
  %v198 = vld [vmem:[%s5] sm:$0xff]
  %v199 = vld [vmem:[%s5 + $0x8] sm:$0xff]
  %v200 = vld [vmem:[%s5 + $0x10] sm:$0xff]
  %v201 = vld [vmem:[%s5 + $0x18] sm:$0xff]
  %v202 = vld [vmem:[%s5 + $0x20] sm:$0xff]
  %v203 = vld [vmem:[%s5 + $0x28] sm:$0xff]
  %v204 = vld [vmem:[%s5 + $0x30] sm:$0xff]
  %v205 = vld [vmem:[%s5 + $0x38] sm:$0xff]
  %v206 = vld [vmem:[%s6] sm:$0x1]
  %v208 = vlaneseq
  %v209 = vshrl.u32 %v208, 7
  %v210 = vsub.s32 0, %v209
  %v211 = vrot.slane %v206, %v210
  %vm213 = vcmask 523264
  %v215 = vsel %vm213, %v197, 0
  %217 = vmatprep.subr.mxu0 0.0
  %218 = vmatpush1.msra.mxu0 %v198
  %219 = vmatprep.subr.mxu0 0.0
  %220 = vmatpush1.msra.mxu0 %v199
  %221 = vmatprep.subr.mxu0 0.0
  %222 = vmatpush1.msra.mxu0 %v200
  %223 = vmatprep.subr.mxu0 0.0
  %224 = vmatpush1.msra.mxu0 %v201
  %225 = vmatprep.subr.mxu0 0.0
  %226 = vmatpush1.msra.mxu0 %v202
  %227 = vmatprep.subr.mxu0 0.0
  %228 = vmatpush1.msra.mxu0 %v203
  %229 = vmatprep.subr.mxu0 0.0
  %230 = vmatpush1.msra.mxu0 %v204
  %231 = vmatprep.subr.mxu0 0.0
  %232 = vmatpush1.msra.mxu0 %v205
  %233 = vmatprep.subr.mxu0 0.0
  %234 = vmatpush1.msra.mxu0 0.0
  %235 = vmatprep.subr.mxu0 0.0
  %236 = vmatpush1.msra.mxu0 0.0
  %237 = vmatprep.subr.mxu0 0.0
  %238 = vmatpush1.msra.mxu0 0.0
  %239 = vmatprep.subr.mxu0 0.0
  %240 = vmatpush1.msra.mxu0 0.0
  %241 = vmatprep.subr.mxu0 0.0
  %242 = vmatpush1.msra.mxu0 0.0
  %243 = vmatprep.subr.mxu0 0.0
  %244 = vmatpush1.msra.mxu0 0.0
  %245 = vmatprep.subr.mxu0 0.0
  %246 = vmatpush1.msra.mxu0 0.0
  %247 = vmatprep.subr.mxu0 0.0
  %248 = vmatpush1.msra.mxu0 0.0
  %249 = vmatprep.subr.mxu0 0.0
  %250 = vmatpush1.msra.mxu0 0.0
  %251 = vmatprep.subr.mxu0 0.0
  %252 = vmatpush1.msra.mxu0 0.0
  %253 = vmatprep.subr.mxu0 0.0
  %254 = vmatpush1.msra.mxu0 0.0
  %255 = vmatprep.subr.mxu0 0.0
  %256 = vmatpush1.msra.mxu0 0.0
  %257 = vmatprep.subr.mxu0 0.0
  %258 = vmatpush1.msra.mxu0 0.0
  %259 = vmatprep.subr.mxu0 0.0
  %260 = vmatpush1.msra.mxu0 0.0
  %261 = vmatprep.subr.mxu0 0.0
  %262 = vmatpush1.msra.mxu0 0.0
  %263 = vmatprep.subr.mxu0 0.0
  %264 = vmatpush1.msra.mxu0 0.0
  %265 = vmatprep.subr.mxu0 0.0
  %266 = vmatpush1.msra.mxu0 0.0
  %267 = vmatprep.subr.mxu0 0.0
  %268 = vmatpush1.msra.mxu0 0.0
  %269 = vmatprep.subr.mxu0 0.0
  %270 = vmatpush1.msra.mxu0 0.0
  %271 = vmatprep.subr.mxu0 0.0
  %272 = vmatpush1.msra.mxu0 0.0
  %273 = vmatprep.subr.mxu0 0.0
  %274 = vmatpush1.msra.mxu0 0.0
  %275 = vmatprep.subr.mxu0 0.0
  %276 = vmatpush1.msra.mxu0 0.0
  %277 = vmatprep.subr.mxu0 0.0
  %278 = vmatpush1.msra.mxu0 0.0
  %279 = vmatprep.subr.mxu0 0.0
  %280 = vmatpush1.msra.mxu0 0.0
  %281 = vmatprep.mubr.f32.mxu0 0.0
  %282 = vmatmul.mubr.f32.gmra.mrb[0].mxu0 %v215
  %v283 = vpop.f32.mrb[0].mxu0
  %v284 = vadd.f32 %v211, %v283
  %v285 = vpop.f32.mrb[0].mxu0
  %286 = vdwg.mxu0
  %v287 = vmax.f32 %v284, 0.0
  %v288 = vld [vmem:[%s7] sm:$0xff]
  %v289 = vld [vmem:[%s7 + $0x8] sm:$0xff]
  %v290 = vld [vmem:[%s7 + $0x10] sm:$0xff]
  %v291 = vld [vmem:[%s7 + $0x18] sm:$0xff]
  %v292 = vld [vmem:[%s7 + $0x20] sm:$0xff]
  %v293 = vld [vmem:[%s7 + $0x28] sm:$0xff]
  %v294 = vld [vmem:[%s7 + $0x30] sm:$0xff]
  %v295 = vld [vmem:[%s7 + $0x38] sm:$0xff]
  %v296 = vld [vmem:[%s8] sm:$0x1]
  %v298 = vlaneseq
  %v299 = vshrl.u32 %v298, 7
  %v300 = vsub.s32 0, %v299
  %v301 = vrot.slane %v296, %v300
  %v304 = vsel %vm213, %v287, 0
  %306 = vmatprep.subr.mxu0 0.0
  %307 = vmatpush1.msra.mxu0 %v288
  %308 = vmatprep.subr.mxu0 0.0
  %309 = vmatpush1.msra.mxu0 %v289
  %310 = vmatprep.subr.mxu0 0.0
  %311 = vmatpush1.msra.mxu0 %v290
  %312 = vmatprep.subr.mxu0 0.0
  %313 = vmatpush1.msra.mxu0 %v291
  %314 = vmatprep.subr.mxu0 0.0
  %315 = vmatpush1.msra.mxu0 %v292
  %316 = vmatprep.subr.mxu0 0.0
  %317 = vmatpush1.msra.mxu0 %v293
  %318 = vmatprep.subr.mxu0 0.0
  %319 = vmatpush1.msra.mxu0 %v294
  %320 = vmatprep.subr.mxu0 0.0
  %321 = vmatpush1.msra.mxu0 %v295
  %322 = vmatprep.subr.mxu0 0.0
  %323 = vmatpush1.msra.mxu0 0.0
  %324 = vmatprep.subr.mxu0 0.0
  %325 = vmatpush1.msra.mxu0 0.0
  %326 = vmatprep.subr.mxu0 0.0
  %327 = vmatpush1.msra.mxu0 0.0
  %328 = vmatprep.subr.mxu0 0.0
  %329 = vmatpush1.msra.mxu0 0.0
  %330 = vmatprep.subr.mxu0 0.0
  %331 = vmatpush1.msra.mxu0 0.0
  %332 = vmatprep.subr.mxu0 0.0
  %333 = vmatpush1.msra.mxu0 0.0
  %334 = vmatprep.subr.mxu0 0.0
  %335 = vmatpush1.msra.mxu0 0.0
  %336 = vmatprep.subr.mxu0 0.0
  %337 = vmatpush1.msra.mxu0 0.0
  %338 = vmatprep.subr.mxu0 0.0
  %339 = vmatpush1.msra.mxu0 0.0
  %340 = vmatprep.subr.mxu0 0.0
  %341 = vmatpush1.msra.mxu0 0.0
  %342 = vmatprep.subr.mxu0 0.0
  %343 = vmatpush1.msra.mxu0 0.0
  %344 = vmatprep.subr.mxu0 0.0
  %345 = vmatpush1.msra.mxu0 0.0
  %346 = vmatprep.subr.mxu0 0.0
  %347 = vmatpush1.msra.mxu0 0.0
  %348 = vmatprep.subr.mxu0 0.0
  %349 = vmatpush1.msra.mxu0 0.0
  %350 = vmatprep.subr.mxu0 0.0
  %351 = vmatpush1.msra.mxu0 0.0
  %352 = vmatprep.subr.mxu0 0.0
  %353 = vmatpush1.msra.mxu0 0.0
  %354 = vmatprep.subr.mxu0 0.0
  %355 = vmatpush1.msra.mxu0 0.0
  %356 = vmatprep.subr.mxu0 0.0
  %357 = vmatpush1.msra.mxu0 0.0
  %358 = vmatprep.subr.mxu0 0.0
  %359 = vmatpush1.msra.mxu0 0.0
  %360 = vmatprep.subr.mxu0 0.0
  %361 = vmatpush1.msra.mxu0 0.0
  %362 = vmatprep.subr.mxu0 0.0
  %363 = vmatpush1.msra.mxu0 0.0
  %364 = vmatprep.subr.mxu0 0.0
  %365 = vmatpush1.msra.mxu0 0.0
  %366 = vmatprep.subr.mxu0 0.0
  %367 = vmatpush1.msra.mxu0 0.0
  %368 = vmatprep.subr.mxu0 0.0
  %369 = vmatpush1.msra.mxu0 0.0
  %370 = vmatprep.mubr.f32.mxu0 0.0
  %371 = vmatmul.mubr.f32.gmra.mrb[0].mxu0 %v304
  %v372 = vpop.f32.mrb[0].mxu0
  %v373 = vadd.f32 %v301, %v372
  %v374 = vpop.f32.mrb[0].mxu0
  %375 = vdwg.mxu0
  %vm376 = vcmask 15360
  %377 = vst.msk [vmem:[%s9] sm:$0xff] %vm376, %v373
  // Predicated region
  $region38: #{critic_forward.1} parent=0 // pred_check
    _
  $region39: #{critic_forward.1} parent=0 // pred_check_branch
    %379 = sbr.rel (0) target = $region41
  $region40: #{critic_forward.1} parent=0 // pred_region
    _
  $region41: #{critic_forward.1} parent=0 // pred_fallthru
    _
  // Predicated region
  $region42: #{critic_forward.1} parent=0 // pred_check
    _
  $region43: #{critic_forward.1} parent=0 // pred_check_branch
    %381 = sbr.rel (0) target = $region45
  $region44: #{critic_forward.1} parent=0 // pred_region
    _
  $region45: #{critic_forward.1} parent=0 // pred_fallthru
    _

</llo_original>
